<compile_context>
chip_gen: v6e
topology: v6e:2x2x1
jax: 0.10.0
libtpu: 0.0.40
codegen_flags: <defaults>
</compile_context>

<pallas_src>
import functools

import numpy as np
import jax
import jax.numpy as jnp
from jax.experimental import pallas as pl
from jax.experimental.pallas import tpu as pltpu

LRELU_SLOPE = 0.1
MXU_DTYPE = jnp.bfloat16      # MXU operand dtype, f32 accumulation
ACT_DTYPE = jnp.bfloat16      # inter-layer activations stored in HBM as bf16
LANE = 128
HALO = 128                    # per-time-tile halo (>= max (K-1)//S over all layers = 14)
TT_MAX = 512                  # max time-tile width (lanes); bounds VMEM working set
TAP_CAP = 2048                # max stacked contraction rows (taps_per_group * CIc)
VMEM_LIMIT = 32 * 1024 * 1024

PERIODS = (2, 3, 5, 7, 11, 17)

# (cin, cout, K, stride, pad, groups)
_S_CONV_CFGS = (
    (1,    16,   15, 1, 7,  1),
    (16,   64,   41, 4, 20, 4),
    (64,   256,  41, 4, 20, 16),
    (256,  1024, 41, 4, 20, 64),
    (1024, 1024, 41, 4, 20, 256),
    (1024, 1024, 5,  1, 2,  1),
)
_S_POST_CFG = (1024, 1, 3, 1, 1, 1)

_P_CONV_CFGS = (
    (1,    32,   5, 3, 2, 1),
    (32,   128,  5, 3, 2, 1),
    (128,  512,  5, 3, 2, 1),
    (512,  1024, 5, 3, 2, 1),
    (1024, 1024, 5, 3, 2, 1),
)
_P_POST_CFG = (1024, 1, 3, 1, 1, 1)


def _round_up(x, m):
    return (x + m - 1) // m * m


def _leaky_relu(x):
    return jnp.where(x > 0, x, LRELU_SLOPE * x)


# ---------------------------------------------------------------------------
# One-time probe of the lane-rotate sign convention used by pltpu.roll.
# We only need "column t <- column t+q"; the probe makes the kernel robust to
# either convention.
# ---------------------------------------------------------------------------
@functools.lru_cache(maxsize=None)
def _roll_matches_jnp_roll():
    def k(x_ref, o_ref):
        o_ref[...] = pltpu.roll(x_ref[...], 127, axis=1)

    x = jnp.arange(128, dtype=jnp.float32).reshape(1, 128)
    y = pl.pallas_call(k, out_shape=jax.ShapeDtypeStruct((1, 128), jnp.float32))(x)
    # jnp.roll(x, 127) puts x[1] at position 0.
    return bool(np.asarray(y)[0, 0] == 1.0)


# ---------------------------------------------------------------------------
# Generic strided / grouped conv1d (+bias, +optional leaky-relu) Pallas kernel
# ---------------------------------------------------------------------------
def _make_conv_kernel(*, S, CIc, W_in, Tt, group_sizes, apply_lrelu, roll_like_jnp):
    offsets = [0]
    for sz in group_sizes:
        offsets.append(offsets[-1] + sz)

    def left_roll(x, q):
        if q == 0:
            return x
        shift = (W_in - q) if roll_like_jnp else q
        return pltpu.roll(x, shift, axis=1)   # col t <- col t+q

    def kernel(x_ref, w_ref, b_ref, o_ref):
        # x_ref : (1, S, CIc, W_in) bf16  -- stride-phase decomposed activations (+halo)
        # w_ref : (1, n_groups, CT, GW) bf16   GW = group_sizes[0]*CIc
        # b_ref : (1, CT, 1) f32
        # o_ref : (1, CT, Tt) bf16
        phases = [x_ref[0, r] for r in range(S)]
        acc = None
        for g, sz in enumerate(group_sizes):
            cols = []
            for p in range(sz):
                k = offsets[g] + p
                cols.append(left_roll(phases[k % S], k // S)[:, :Tt])
            stacked = cols[0] if sz == 1 else jnp.concatenate(cols, axis=0)
            wg = w_ref[0, g][:, :sz * CIc]
            d = jnp.dot(wg, stacked, preferred_element_type=jnp.float32)
            acc = d if acc is None else acc + d
        acc = acc + b_ref[0]
        if apply_lrelu:
            acc = jnp.where(acc > 0, acc, LRELU_SLOPE * acc)
        o_ref[0] = acc.astype(o_ref.dtype)

    return kernel


def _time_tiling(T_out, q_max):
    """Pick (Tt, n_tt, W_in): tile width, number of tiles, in-kernel input width."""
    need = T_out + q_max
    t_full = _round_up(need, LANE)
    if t_full <= TT_MAX:
        return t_full, 1, t_full
    n_tt = -(-need // TT_MAX)
    return TT_MAX, n_tt, TT_MAX + HALO


def pallas_conv1d(x, layer, *, apply_lrelu):
    """x: (N, Cin, T) -> (N, Cout, T_out) in ACT_DTYPE (PyTorch Conv1d semantics)."""
    cfg = layer["cfg"]
    K, S, P = cfg["K"], cfg["S"], cfg["P"]
    CT, CIc, n_chunks = cfg["CT"], cfg["CIc"], cfg["n_chunks"]
    sizes = cfg["group_sizes"]
    N, Cin, T = x.shape
    assert Cin == cfg["cin"], (Cin, cfg["cin"])
    Cout = CT * n_chunks

    T_out = (T + 2 * P - K) // S + 1
    q_max = (K - 1) // S
    Tt, n_tt, W_in = _time_tiling(T_out, q_max)
    if n_tt > 1:
        assert q_max <= HALO
    L = S * n_tt * Tt
    right = L - P - T
    assert right >= 0

    # Zero-pad (left: conv padding, right: conv padding + lane alignment) and split
    # into stride phases per time tile: xph[n, tt, r, c, u] = xpad[n, c, S*(tt*Tt+u)+r].
    xpad = jnp.pad(x.astype(ACT_DTYPE), ((0, 0), (0, 0), (P, right)))
    xph = xpad.reshape(N, Cin, n_tt, Tt, S).transpose(0, 2, 4, 1, 3)   # (N,n_tt,S,Cin,Tt)
    if n_tt == 1:
        tiles = xph
    else:
        # halo: first HALO columns of the NEXT time tile (zeros for the last tile)
        nxt = jnp.concatenate(
            [xph[:, 1:, :, :, :HALO], jnp.zeros_like(xph[:, :1, :, :, :HALO])], axis=1)
        tiles = jnp.concatenate([xph, nxt], axis=-1)                   # (N,n_tt,S,Cin,W_in)
    tiles = tiles.reshape(N * n_tt, S, Cin, W_in)

    cin_chunked = CIc != Cin
    kernel = _make_conv_kernel(
        S=S, CIc=CIc, W_in=W_in, Tt=Tt, group_sizes=sizes,
        apply_lrelu=apply_lrelu, roll_like_jnp=_roll_matches_jnp_roll())

    n_groups = len(sizes)
    GW = sizes[0] * CIc
    if cin_chunked:   # grouped layer: each out-channel chunk reads only its cin slice
        x_index = lambda c, n, j: (n * n_tt + j, 0, c, 0)
    else:
        x_index = lambda c, n, j: (n * n_tt + j, 0, 0, 0)

    out = pl.pallas_call(
        kernel,
        out_shape=jax.ShapeDtypeStruct((N, Cout, n_tt * Tt), ACT_DTYPE),
        grid_spec=pltpu.PrefetchScalarGridSpec(
            num_scalar_prefetch=0,
            # out-channel chunk OUTERMOST: weights are DMA'd once per chunk, not once
            # per batch row / time tile.
            grid=(n_chunks, N, n_tt),
            in_specs=[
                pl.BlockSpec((1, S, CIc, W_in), x_index),
                pl.BlockSpec((1, n_groups, CT, GW), lambda c, n, j: (c, 0, 0, 0)),
                pl.BlockSpec((1, CT, 1), lambda c, n, j: (c, 0, 0)),
            ],
            out_specs=pl.BlockSpec((1, CT, Tt), lambda c, n, j: (n, c, j)),
        ),
        compiler_params=pltpu.CompilerParams(
            dimension_semantics=("parallel", "parallel", "parallel"),
            vmem_limit_bytes=VMEM_LIMIT),
    )(tiles, layer["w"], layer["b"])

    return out[:, :, :T_out]


# ---------------------------------------------------------------------------
# conv_post (Cout=1, K=3): plain XLA matvec (review: M=1 matmul wastes the MXU)
# ---------------------------------------------------------------------------
def xla_post_conv1d(h, layer):
    cfg = layer["cfg"]
    K, P = cfg["K"], cfg["P"]
    w = layer["w_raw"].astype(MXU_DTYPE)            # (1, Cin, K)
    N, Cin, T = h.shape
    T_out = T + 2 * P - K + 1
    hp = jnp.pad(h.astype(MXU_DTYPE), ((0, 0), (0, 0), (P, P)))
    acc = jnp.zeros((N, T_out), jnp.float32)
    for k in range(K):
        acc = acc + jnp.einsum("c,nct->nt", w[0, :, k], hp[:, :, k:k + T_out],
                               preferred_element_type=jnp.float32)
    acc = acc + layer["b_raw"][0]
    return acc[:, None, :]                          # (N, 1, T_out) f32


# ---------------------------------------------------------------------------
# Parameter preparation
# ---------------------------------------------------------------------------
def _chunking(cin, cout, G):
    copg = cout // G
    if G == 1:
        CT = cout if cout <= 128 else 128
        CIc = cin
    else:
        gb = min(G, max(1, 128 // copg))    # groups per dense block-diagonal chunk
        CT = gb * copg
        CIc = gb * (cin // G)
    assert cout % CT == 0 and cin % CIc == 0
    return CT, CIc, cout // CT


def _tap_groups(K, CIc):
    """Balanced tap groups with contraction (sz*CIc) as deep as possible (<= TAP_CAP)."""
    tg_max = max(1, min(K, TAP_CAP // max(CIc, 1)))
    n_groups = -(-K // tg_max)
    base, rem = divmod(K, n_groups)
    return tuple(base + (1 if i < rem else 0) for i in range(n_groups))


def _densify_weight(w, G, CT, CIc, n_chunks):
    """w: (Cout, Cin//G, K) -> per-chunk dense block-diagonal (n_chunks, K, CT, CIc)."""
    w = np.asarray(w, np.float32)
    Cout, Cin_g, K = w.shape
    Cin = Cin_g * G
    copg = Cout // G
    wd = np.zeros((n_chunks, K, CT, CIc), np.float32)
    for co in range(Cout):
        g = co // copg
        c = co // CT
        o = co - c * CT
        i0 = g * Cin_g - (c * CIc if CIc != Cin else 0)
        wd[c, :, o, i0:i0 + Cin_g] = w[co].T
    return wd


def _group_taps(wd, sizes, CIc):
    """(n_chunks, K, CT, CIc) -> (n_chunks, n_groups, CT, sizes[0]*CIc)."""
    n_chunks, K, CT, _ = wd.shape
    GW = sizes[0] * CIc
    wg = np.zeros((n_chunks, len(sizes), CT, GW), np.float32)
    k = 0
    for g, sz in enumerate(sizes):
        for p in range(sz):
            wg[:, g, :, p * CIc:(p + 1) * CIc] = wd[:, k]
            k += 1
    return wg


def make_conv_layer(key, cin, cout, K, S, P, G):
    kw, kb = jax.random.split(key)
    fan_in = (cin // G) * K
    w = jax.random.normal(kw, (cout, cin // G, K), jnp.float32) / np.sqrt(fan_in)
    b = 0.1 * jax.random.normal(kb, (cout,), jnp.float32)

    CT, CIc, n_chunks = _chunking(cin, cout, G)
    sizes = _tap_groups(K, CIc)
    # partial-group weight slices in the kernel must stay lane aligned
    assert len(set(sizes)) == 1 or CIc % LANE == 0, (sizes, CIc)
    wd = _densify_weight(w, G, CT, CIc, n_chunks)
    wg = _group_taps(wd, sizes, CIc)

    return dict(
        w=jnp.asarray(wg, MXU_DTYPE),
        b=jnp.asarray(np.asarray(b).reshape(n_chunks, CT, 1), jnp.float32),
        w_raw=w, b_raw=b,
        cfg=dict(cin=cin, cout=cout, K=K, S=S, P=P, G=G,
                 CT=CT, CIc=CIc, n_chunks=n_chunks, group_sizes=sizes),
    )


def make_post_layer(key, cin, cout, K, S, P, G):
    kw, kb = jax.random.split(key)
    fan_in = cin * K
    w = jax.random.normal(kw, (cout, cin, K), jnp.float32) / np.sqrt(fan_in)
    b = 0.1 * jax.random.normal(kb, (cout,), jnp.float32)
    return dict(w_raw=w, b_raw=b, cfg=dict(cin=cin, cout=cout, K=K, S=S, P=P, G=G))


def init_mpd_params(key):
    discs = []
    keys = jax.random.split(key, 1 + len(PERIODS))
    ks = jax.random.split(keys[0], len(_S_CONV_CFGS) + 1)
    convs = [make_conv_layer(ks[i], *_S_CONV_CFGS[i]) for i in range(len(_S_CONV_CFGS))]
    discs.append(dict(kind="S", convs=convs, post=make_post_layer(ks[-1], *_S_POST_CFG)))
    for j, p in enumerate(PERIODS):
        kp = jax.random.split(keys[1 + j], len(_P_CONV_CFGS) + 1)
        convs = [make_conv_layer(kp[i], *_P_CONV_CFGS[i]) for i in range(len(_P_CONV_CFGS))]
        discs.append(dict(kind="P", period=p, convs=convs,
                          post=make_post_layer(kp[-1], *_P_POST_CFG)))
    return discs


# ---------------------------------------------------------------------------
# Discriminator forward passes (Pallas path)
# ---------------------------------------------------------------------------
def disc_s_forward(d, x):
    fmap = []
    h = x.astype(ACT_DTYPE)
    for layer in d["convs"]:
        h = pallas_conv1d(h, layer, apply_lrelu=True)
        fmap.append(h)
    h = xla_post_conv1d(h, d["post"])
    fmap.append(h)
    return h.reshape(h.shape[0], -1), fmap


def _fold_period(x, period):
    B, C, T = x.shape
    if T % period != 0:
        n_pad = period - T % period
        x = jnp.pad(x, ((0, 0), (0, 0), (0, n_pad)), mode="reflect")
        T += n_pad
    x4 = x.reshape(B, C, T // period, period)                 # (B, C, H, W)
    return x4.transpose(0, 3, 1, 2).reshape(B * period, C, T // period)


def _unfold_period(h, B, period):
    N, C, H = h.shape
    return h.reshape(B, period, C, H).transpose(0, 2, 3, 1)   # (B, C, H, W)


def disc_p_forward(d, x):
    period = d["period"]
    B = x.shape[0]
    # No padding of the folded batch: each period runs exactly B*period rows.
    h = _fold_period(x.astype(ACT_DTYPE), period)             # (B*period, 1, H)
    fmap = []
    for layer in d["convs"]:
        h = pallas_conv1d(h, layer, apply_lrelu=True)
        fmap.append(_unfold_period(h, B, period))
    h = xla_post_conv1d(h, d["post"])
    hw = _unfold_period(h, B, period)
    fmap.append(hw)
    return hw.reshape(B, -1), fmap


def mpd_forward(discs, y, y_hat):
    y_d_rs, y_d_gs, fmap_rs, fmap_gs = [], [], [], []
    for d in discs:
        fwd = disc_s_forward if d["kind"] == "S" else disc_p_forward
        r_out, r_f = fwd(d, y)
        g_out, g_f = fwd(d, y_hat)
        y_d_rs.append(r_out); fmap_rs.append(r_f)
        y_d_gs.append(g_out); fmap_gs.append(g_f)
    return y_d_rs, y_d_gs, fmap_rs, fmap_gs


# ---------------------------------------------------------------------------
# Pure-JAX reference (mirrors the PyTorch forward; bf16 products, f32 accumulation)
# ---------------------------------------------------------------------------
def _ref_conv1d(x, layer):
    cfg = layer["cfg"]
    K, S, P, G = cfg["K"], cfg["S"], cfg["P"], cfg["G"]
    w, b = layer["w_raw"], layer["b_raw"]
    N, Cin, T = x.shape
    Cout, Cin_g, _ = w.shape
    T_out = (T + 2 * P - K) // S + 1
    xp = jnp.pad(x.astype(jnp.float32), ((0, 0), (0, 0), (P, P))).astype(MXU_DTYPE)
    xg = xp.reshape(N, G, Cin_g, T + 2 * P)
    wq = w.reshape(G, Cout // G, Cin_g, K).astype(MXU_DTYPE)
    acc = jnp.zeros((N, G, Cout // G, T_out), jnp.float32)
    for k in range(K):
        sl = xg[:, :, :, k: k + S * (T_out - 1) + 1: S]
        acc = acc + jnp.einsum("goc,ngct->ngot", wq[:, :, :, k], sl,
                               preferred_element_type=jnp.float32)
    return acc.reshape(N, Cout, T_out) + b[None, :, None]


def _ref_conv2d_k1(x, layer):
    cfg = layer["cfg"]
    K, S, P = cfg["K"], cfg["S"], cfg["P"]
    w, b = layer["w_raw"], layer["b_raw"]      # (Cout, Cin, K) -- kernel width 1
    B, Cin, H, W = x.shape
    Cout = w.shape[0]
    H_out = (H + 2 * P - K) // S + 1
    xp = jnp.pad(x.astype(jnp.float32), ((0, 0), (0, 0), (P, P), (0, 0))).astype(MXU_DTYPE)
    wq = w.astype(MXU_DTYPE)
    acc = jnp.zeros((B, Cout, H_out, W), jnp.float32)
    for k in range(K):
        sl = xp[:, :, k: k + S * (H_out - 1) + 1: S, :]
        acc = acc + jnp.einsum("oc,nchw->nohw", wq[:, :, k], sl,
                               preferred_element_type=jnp.float32)
    return acc + b[None, :, None, None]


def ref_disc_s_forward(d, x):
    fmap = []
    h = x
    for layer in d["convs"]:
        h = _leaky_relu(_ref_conv1d(h, layer))
        fmap.append(h)
    h = _ref_conv1d(h, d["post"])
    fmap.append(h)
    return h.reshape(h.shape[0], -1), fmap


def ref_disc_p_forward(d, x):
    period = d["period"]
    B, C, T = x.shape
    if T % period != 0:
        n_pad = period - T % period
        x = jnp.pad(x, ((0, 0), (0, 0), (0, n_pad)), mode="reflect")
        T += n_pad
    h = x.reshape(B, C, T // period, period)
    fmap = []
    for layer in d["convs"]:
        h = _leaky_relu(_ref_conv2d_k1(h, layer))
        fmap.append(h)
    h = _ref_conv2d_k1(h, d["post"])
    fmap.append(h)
    return h.reshape(B, -1), fmap


def ref_mpd_forward(discs, y, y_hat):
    y_d_rs, y_d_gs, fmap_rs, fmap_gs = [], [], [], []
    for d in discs:
        fwd = ref_disc_s_forward if d["kind"] == "S" else ref_disc_p_forward
        r_out, r_f = fwd(d, y)
        g_out, g_f = fwd(d, y_hat)
        y_d_rs.append(r_out); fmap_rs.append(r_f)
        y_d_gs.append(g_out); fmap_gs.append(g_f)
    return y_d_rs, y_d_gs, fmap_rs, fmap_gs


# ---------------------------------------------------------------------------
if __name__ == "__main__":
    B, T = 2, 256
    key = jax.random.PRNGKey(0)
    kparams, ky, kg, kt = jax.random.split(key, 4)

    discs = init_mpd_params(kparams)
    y = jax.random.normal(ky, (B, 1, T), jnp.float32)
    y_hat = jax.random.normal(kg, (B, 1, T), jnp.float32)

    y_d_rs, y_d_gs, fmap_rs, fmap_gs = mpd_forward(discs, y, y_hat)
    jax.block_until_ready(y_d_gs[-1])

    r_d_rs, r_d_gs, r_fmap_rs, r_fmap_gs = ref_mpd_forward(discs, y, y_hat)

    def _chk(a, b, name):
        np.testing.assert_allclose(np.asarray(a).astype(np.float32),
                                   np.asarray(b).astype(np.float32),
                                   rtol=2e-2, atol=2e-2, err_msg=name)

    for i in range(len(y_d_rs)):
        _chk(y_d_rs[i], r_d_rs[i], f"y_d_r[{i}]")
        _chk(y_d_gs[i], r_d_gs[i], f"y_d_g[{i}]")
        for j in range(len(fmap_rs[i])):
            _chk(fmap_rs[i][j], r_fmap_rs[i][j], f"fmap_r[{i}][{j}]")
            _chk(fmap_gs[i][j], r_fmap_gs[i][j], f"fmap_g[{i}][{j}]")

    # Exercise + verify the time-tiled (n_tt > 1, halo) path on a longer sequence,
    # using the grouped 1024->1024 K=41 layer (CIc=128, partial tap groups).
    layer = discs[0]["convs"][4]
    xt = jax.random.normal(kt, (1, 1024, 2048), jnp.float32)
    out_t = pallas_conv1d(xt, layer, apply_lrelu=False)
    jax.block_until_ready(out_t)
    _chk(out_t, _ref_conv1d(xt, layer), "tiled_conv")

    print("KERNEL_OK")
</pallas_src>

<mosaic_0001>
module attributes {stable_mosaic.version = 11 : i64} {
  func.func @k(%arg0: memref<1x128xf32, #tpu.memory_space<vmem>>, %arg1: memref<1x128xf32, #tpu.memory_space<vmem>>) attributes {dimension_semantics = [], scalar_prefetch = 0 : i64, scratch_operands = 0 : i64, tpu.core_type = #tpu.core_type<tc>} {
    %c0 = arith.constant 0 : index
    %c0_0 = arith.constant 0 : index
    %0 = vector.load %arg0[%c0, %c0_0] : memref<1x128xf32, #tpu.memory_space<vmem>>, vector<1x128xf32>
    %c127_i32 = arith.constant 127 : i32
    %1 = tpu.dynamic_rotate %0 by %c127_i32 dim 1 : vector<1x128xf32>, i32 -> vector<1x128xf32>
    %c0_1 = arith.constant 0 : index
    %c0_2 = arith.constant 0 : index
    %2 = vector.load %arg1[%c0_1, %c0_2] : memref<1x128xf32, #tpu.memory_space<vmem>>, vector<1x128xf32>
    tpu.vector_store %arg1[%c0_1, %c0_2], %1 {strides = array<i32>} : memref<1x128xf32, #tpu.memory_space<vmem>>, vector<1x128xf32>,
    return
  }
}

</mosaic_0001>

<llo_original>
// kernel: tpu_custom_call.1
$region0: #{tpu_custom_call.1}
  #allocation0 [shape = 'u32[]', space=smem, size = 0x4, offset = 0x4, fixed_abs, tag = 'smem constant byte address 0x4 - core index']
  #allocation1 [shape = 'u32[144,128]{1,0:T(1,128)}', space=vmem, size = 0x12000, scoped, tag = 'internal scratch']
  %s0 = inlined_call_operand.hbm [shape: f32[1,128], index: 0, kind: input, shape index: {}]
  %s1 = inlined_call_operand.hbm [shape: f32[1,128], index: 1, kind: output, shape index: {}]
  %s2 = sld [smem:[#allocation0]]
  $region18: #{tpu_custom_call.1} parent=0
    _
  %s4 = ssub.s32 1, %s2
  %s5 = scalar_select 0, %s4, %s2
  $region1: #{tpu_custom_call.1} parent=0
    #allocation2 [shape = 'u8[512]{0}', space=vmem, size = 0x400, scoped, tag = 'input window, operand 0, single buffered']
    #allocation3 [shape = 's32[1]{0}', space=sflag, size = 0x4, scoped, tag = 'scoped memory for tpu_custom_call.1']
    #allocation4 [shape = 's32[1]{0}', space=sflag, size = 0x4, scoped, tag = 'scoped memory for tpu_custom_call.1']
    #allocation5 [shape = 'u8[512]{0}', space=vmem, size = 0x400, scoped, tag = 'output window, operand 0, single buffered']
    %6 = vsyncpa [#allocation3], 0
    %7 = vsyncpa [#allocation4], 0
    // Predicated region
    $region2: #{tpu_custom_call.1} parent=1 // pred_check
      _
    $region3: #{tpu_custom_call.1} parent=1 // pred_check_branch
      %9 = sbr.rel (0) target = $region5
    $region4: #{tpu_custom_call.1} parent=1 // pred_region
      %s11 = ssub.s32 16, 16
      %12 = vsyncadd [#allocation3], %s11
      %s14 = sshll.u32 [#allocation2], 4
      %s15 = int_to_ptr.vmem [resolvable:$true] %s14
      %17 = dma.hbm_to_vmem [thread:$0]  %s0, 16, %s15, [#allocation3]
    $region5: #{tpu_custom_call.1} parent=1 // pred_fallthru
      _
    // Predicated region
    $region6: #{tpu_custom_call.1} parent=1 // pred_check
      _
    $region7: #{tpu_custom_call.1} parent=1 // pred_check_branch
      %19 = sbr.rel (0) target = $region9
    $region8: #{tpu_custom_call.1} parent=1 // pred_region
      %20 = dma.done [#allocation3], 16
    $region9: #{tpu_custom_call.1} parent=1 // pred_fallthru
      _
    %v21 = vld [vmem:[#allocation2] sm:$0x1]
    %22 = vrot.lane.b32.xlu0 %v21, 127
    %v23 = vpop.permute.xlu0 %22
    %24 = vst [vmem:[#allocation5] sm:$0x1] %v23
    // Predicated region
    $region10: #{tpu_custom_call.1} parent=1 // pred_check
      _
    $region11: #{tpu_custom_call.1} parent=1 // pred_check_branch
      %26 = sbr.rel (0) target = $region13
    $region12: #{tpu_custom_call.1} parent=1 // pred_region
      %s28 = ssub.s32 16, 16
      %29 = vsyncadd [#allocation4], %s28
      %s31 = sshll.u32 [#allocation5], 4
      %s32 = int_to_ptr.vmem [resolvable:$true] %s31
      %34 = dma.vmem_to_hbm [thread:$0]  %s32, 16, %s1, [#allocation4]
    $region13: #{tpu_custom_call.1} parent=1 // pred_fallthru
      _
    // Predicated region
    $region14: #{tpu_custom_call.1} parent=1 // pred_check
      _
    $region15: #{tpu_custom_call.1} parent=1 // pred_check_branch
      %36 = sbr.rel (0) target = $region17
    $region16: #{tpu_custom_call.1} parent=1 // pred_region
      %37 = dma.done [#allocation4], 16
    $region17: #{tpu_custom_call.1} parent=1 // pred_fallthru
      _
    %38 = vsyncpa [#allocation3], 1
    %39 = vsyncpa [#allocation4], 1

</llo_original>
